<compile_context>
chip_gen: v6e
topology: v6e:2x2x1
jax: 0.10.0
libtpu: 0.0.40
codegen_flags: <defaults>
</compile_context>

<pallas_src>
import numpy as np
import jax
import jax.numpy as jnp
from jax.experimental import pallas as pl
from jax.experimental.pallas import tpu as pltpu


# --------------------------------------------------------------------------- #
# Pallas kernel: broadcasted select over a (b_tile, F, t_tile) spectrogram tile
# --------------------------------------------------------------------------- #
def _mask_kernel(spec_ref, mask_ref, out_ref):
    # spec_ref: (Bblk, F, Tt) spectrogram tile.
    # mask_ref: (Bblk, 1, Tt) int8 keep mask (nonzero = keep), broadcast over F.
    spec = spec_ref[...]
    keep = mask_ref[...] != 0
    out_ref[...] = jnp.where(keep, spec, jnp.zeros_like(spec))


def _cdiv(a, b):
    return -(-a // b)


def _tpu_vmem_and_cores():
    """Best-effort hardware query; conservative fallback (64 MiB VMEM, 1 TC)."""
    vmem_cap, num_cores = 64 << 20, 1
    try:
        info = pltpu.get_tpu_info()
        vmem_cap = int(getattr(info, "vmem_capacity_bytes", vmem_cap))
        num_cores = int(getattr(info, "num_cores",
                                getattr(info, "num_tensorcores", num_cores)))
    except Exception:
        pass
    return vmem_cap, num_cores


def _choose_tiles(B, F, T, itemsize, vmem_cap, num_cores):
    """Pick lane-dense (b_tile, t_tile).

    Prefer t_tile = T (one fully contiguous row of F*T bytes per sample per
    DMA); only time-block (multiple-of-128 tile, ragged last block) when a
    single sample exceeds the tile budget.
    """
    max_tile_bytes = min(8 << 20, max(vmem_cap // 8, 1 << 20))
    per_sample = F * T * itemsize
    if per_sample <= max_tile_bytes:
        t_tile = T
        b_tile = max(1, min(B, max_tile_bytes // per_sample))
    else:
        b_tile = 1
        t_tile = max(128, (max_tile_bytes // (F * itemsize)) // 128 * 128)
        t_tile = min(t_tile, T)

    # Dual-TensorCore chips (v7x): keep >= num_cores parallel grid steps so the
    # "parallel" axes can be sharded across cores. No-op on v5e/v6e (1 TC).
    if num_cores > 1 and _cdiv(B, b_tile) * _cdiv(T, t_tile) < num_cores:
        if B >= num_cores:
            b_tile = _cdiv(B, num_cores)
        elif T >= 128 * num_cores:
            t_tile = max(128, (_cdiv(T, num_cores) // 128) * 128)
    return b_tile, t_tile


def _apply_time_mask(input_spec, keep_mask):
    """Run the Pallas masking kernel over a (batch-blocks, time-blocks) grid."""
    B, F, T = input_spec.shape
    itemsize = input_spec.dtype.itemsize
    vmem_cap, num_cores = _tpu_vmem_and_cores()
    b_tile, t_tile = _choose_tiles(B, F, T, itemsize, vmem_cap, num_cores)
    grid = (_cdiv(B, b_tile), _cdiv(T, t_tile))

    # Explicit scoped-VMEM budget: double-buffered in + out spec tiles + mask
    # tiles, plus headroom; never above physical capacity (v7x: 64 MiB).
    spec_tile = b_tile * F * t_tile * itemsize
    mask_tile = b_tile * t_tile * keep_mask.dtype.itemsize
    vmem_limit = int(min(vmem_cap,
                         max(32 << 20, 2 * (2 * spec_tile + mask_tile) + (4 << 20))))

    cost = pl.CostEstimate(
        flops=B * F * T,
        transcendentals=0,
        bytes_accessed=2 * B * F * T * itemsize + B * T * keep_mask.dtype.itemsize,
    )

    return pl.pallas_call(
        _mask_kernel,
        out_shape=jax.ShapeDtypeStruct((B, F, T), input_spec.dtype),
        grid_spec=pltpu.PrefetchScalarGridSpec(
            num_scalar_prefetch=0,
            grid=grid,
            in_specs=[
                pl.BlockSpec((b_tile, F, t_tile), lambda b, t: (b, 0, t)),
                pl.BlockSpec((b_tile, 1, t_tile), lambda b, t: (b, 0, t)),
            ],
            out_specs=pl.BlockSpec((b_tile, F, t_tile), lambda b, t: (b, 0, t)),
        ),
        compiler_params=pltpu.CompilerParams(
            dimension_semantics=("parallel", "parallel"),
            vmem_limit_bytes=vmem_limit,
        ),
        cost_estimate=cost,
    )(input_spec, keep_mask)


# --------------------------------------------------------------------------- #
# On-device patch selection (no host sync, no host RNG, fully jittable)
# --------------------------------------------------------------------------- #
def _build_keep_mask(key, length, B, T, patch_size, mask_patches):
    length = jnp.asarray(length).astype(jnp.int32)
    min_len = jnp.min(length)

    # Resolve number of patches to mask (same logic as the PyTorch module).
    if mask_patches >= 1:
        n_mask = jnp.int32(int(mask_patches))
    else:
        len_fraction = (min_len.astype(jnp.float32)
                        * jnp.float32(mask_patches)).astype(jnp.int32)
        n_mask = len_fraction // patch_size + (
            len_fraction % patch_size != 0).astype(jnp.int32)
    n_mask = jnp.where(min_len < patch_size * n_mask,
                       min_len // patch_size, n_mask)

    # Candidates per sample: range(cur_len // patch_size - 1), as in PyTorch.
    num_patches = length // patch_size - 1
    # NOTE: PyTorch's random.sample would raise if a sample has fewer candidate
    # patches than n_mask; we clamp instead (documented behavioral deviation).
    n_mask = jnp.maximum(0, jnp.minimum(n_mask, jnp.min(num_patches)))

    # Sampling without replacement: per-sample uniforms, invalid candidates
    # pushed to +inf, rank via double argsort, pick the n_mask smallest.
    P = max(T // patch_size, 1)  # static upper bound on candidate patches
    u = jax.random.uniform(key, (B, P), dtype=jnp.float32)
    valid = jnp.arange(P)[None, :] < num_patches[:, None]
    u = jnp.where(valid, u, jnp.inf)
    order = jnp.argsort(u, axis=1)
    ranks = jnp.argsort(order, axis=1)
    chosen = (ranks < n_mask) & valid                     # (B, P)

    # Expand per-patch decisions to time columns; trailing columns past the
    # last full patch are never masked (extra always-False slot at index P).
    chosen = jnp.pad(chosen, ((0, 0), (0, 1)))
    patch_of_t = jnp.minimum(jnp.arange(T) // patch_size, P)
    masked_cols = jnp.take(chosen, patch_of_t, axis=1)    # (B, T)
    keep = jnp.where(masked_cols, 0, 1).astype(jnp.int8)
    return keep[:, None, :]                               # (B, 1, T) int8


def spec_masked_patch_augmentation(
    input_spec,
    length,
    *,
    patch_size: int = 48,
    mask_patches: float = 10.0,
    freq_masks: int = 0,
    freq_width: int = 0,
    key=None,
):
    """Reproduces SpecMaskedPatchAugmentation.forward.

    input_spec: (B, F, T) float array
    length:     (B,) int array of valid time lengths
    key:        jax PRNG key for the patch draw (defaults to PRNGKey(0))
    Returns (augmented_spec, length).
    """
    if mask_patches < 0:
        raise ValueError("mask_patches cannot be negative")
    if freq_masks > 0:
        # TODO(synk): freq_masks > 0 would invoke SpecAugment frequency masking;
        # the default config (freq_masks=0) disables it, so it is not implemented.
        raise NotImplementedError("freq_masks > 0 not supported in this kernel")
    if key is None:
        key = jax.random.PRNGKey(0)

    input_spec = jnp.asarray(input_spec)
    B, F, T = input_spec.shape

    keep_mask = _build_keep_mask(key, length, B, T, patch_size, mask_patches)
    augmented = _apply_time_mask(input_spec, keep_mask)
    return augmented, length


if __name__ == "__main__":
    # Small deterministic example: B=2, F=16 freq bins, T=128 time steps,
    # patch_size=16, 2 masked patches per sample.
    B, F, T = 2, 16, 128
    patch_size = 16
    mask_patches = 2.0

    key = jax.random.PRNGKey(0)
    k_data, k_mask = jax.random.split(key)
    input_spec = jax.random.normal(k_data, (B, F, T), dtype=jnp.float32)
    length = jnp.array([128, 96], dtype=jnp.int32)

    out_spec, out_len = spec_masked_patch_augmentation(
        input_spec,
        length,
        patch_size=patch_size,
        mask_patches=mask_patches,
        key=k_mask,
    )
    out_spec = jax.block_until_ready(out_spec)

    # Sanity checks: shape/dtype preserved, unmasked columns untouched,
    # each sample has exactly 2 * patch_size zeroed time columns, and the
    # zeroed columns lie inside the valid candidate region.
    assert out_spec.shape == input_spec.shape
    assert out_spec.dtype == input_spec.dtype
    out_np = np.asarray(out_spec)
    in_np = np.asarray(input_spec)
    len_np = np.asarray(length)
    for b in range(B):
        col_zeroed = np.all(out_np[b] == 0.0, axis=0)  # (T,)
        assert int(col_zeroed.sum()) == 2 * patch_size, int(col_zeroed.sum())
        candidate_cols = (int(len_np[b]) // patch_size - 1) * patch_size
        assert not col_zeroed[candidate_cols:].any()
        np.testing.assert_array_equal(out_np[b][:, ~col_zeroed],
                                      in_np[b][:, ~col_zeroed])
    np.testing.assert_array_equal(np.asarray(out_len), len_np)

    print("KERNEL_OK")
</pallas_src>

<mosaic_0001>
module attributes {stable_mosaic.version = 11 : i64} {
  func.func @_mask_kernel(%arg0: i32, %arg1: i32, %arg2: memref<2x16x128xf32, #tpu.memory_space<vmem>>, %arg3: memref<2x1x128xi8, #tpu.memory_space<vmem>>, %arg4: memref<2x16x128xf32, #tpu.memory_space<vmem>>) attributes {dimension_semantics = [#tpu.dimension_semantics<parallel>, #tpu.dimension_semantics<parallel>], iteration_bounds = array<i64: 1, 1>, scalar_prefetch = 0 : i64, scratch_operands = 0 : i64, tpu.core_type = #tpu.core_type<tc>, window_params = [{transform_indices = @transform_0, window_bounds = array<i64: 2, 16, 128>}, {transform_indices = @transform_1, window_bounds = array<i64: 2, 1, 128>}, {transform_indices = @transform_2, window_bounds = array<i64: 2, 16, 128>}]} {
    %c0 = arith.constant 0 : index
    %c0_0 = arith.constant 0 : index
    %c0_1 = arith.constant 0 : index
    %0 = vector.load %arg2[%c0, %c0_0, %c0_1] : memref<2x16x128xf32, #tpu.memory_space<vmem>>, vector<2x16x128xf32>
    %c0_2 = arith.constant 0 : index
    %c0_3 = arith.constant 0 : index
    %c0_4 = arith.constant 0 : index
    %1 = vector.load %arg3[%c0_2, %c0_3, %c0_4] : memref<2x1x128xi8, #tpu.memory_space<vmem>>, vector<2x1x128xi8>
    %c0_i8 = arith.constant 0 : i8
    %2 = vector.broadcast %c0_i8 : i8 to vector<2x1x128xi8>
    %3 = arith.cmpi ne, %1, %2 : vector<2x1x128xi8>
    %cst = arith.constant 0.000000e+00 : f32
    %4 = vector.broadcast %cst : f32 to vector<2x16x128xf32>
    %5 = vector.shape_cast %3 : vector<2x1x128xi1> to vector<2x1x128xi1>
    %6 = vector.broadcast %5 : vector<2x1x128xi1> to vector<2x16x128xi1>
    %7 = arith.select %6, %0, %4 : vector<2x16x128xi1>, vector<2x16x128xf32>
    %c0_5 = arith.constant 0 : index
    %c0_6 = arith.constant 0 : index
    %c0_7 = arith.constant 0 : index
    %8 = vector.load %arg4[%c0_5, %c0_6, %c0_7] : memref<2x16x128xf32, #tpu.memory_space<vmem>>, vector<2x16x128xf32>
    tpu.vector_store %arg4[%c0_5, %c0_6, %c0_7], %7 {strides = array<i32>} : memref<2x16x128xf32, #tpu.memory_space<vmem>>, vector<2x16x128xf32>,
    return
  }
  func.func @transform_0(%arg0: i32, %arg1: i32) -> (i32, i32, i32) {
    %c0_i32 = arith.constant 0 : i32
    %c0_i32_0 = arith.constant 0 : i32
    return %arg0, %c0_i32, %arg1 : i32, i32, i32
  }
  func.func @transform_1(%arg0: i32, %arg1: i32) -> (i32, i32, i32) {
    %c0_i32 = arith.constant 0 : i32
    %c0_i32_0 = arith.constant 0 : i32
    return %arg0, %c0_i32, %arg1 : i32, i32, i32
  }
  func.func @transform_2(%arg0: i32, %arg1: i32) -> (i32, i32, i32) {
    %c0_i32 = arith.constant 0 : i32
    %c0_i32_0 = arith.constant 0 : i32
    return %arg0, %c0_i32, %arg1 : i32, i32, i32
  }
}

</mosaic_0001>

<llo_original>
// kernel: tpu_custom_call.1
$region0: #{tpu_custom_call.1}
  #allocation0 [shape = 'u32[]', space=smem, size = 0x4, offset = 0x4, fixed_abs, tag = 'smem constant byte address 0x4 - core index']
  #allocation1 [shape = 'u32[144,128]{1,0:T(1,128)}', space=vmem, size = 0x12000, scoped, tag = 'internal scratch']
  %s0 = inlined_call_operand.hbm [shape: f32[2,16,128], index: 0, kind: input, shape index: {}]
  %s1 = inlined_call_operand.vmem [shape: s8[2,1,128], index: 1, kind: input, shape index: {}]
  %s2 = inlined_call_operand.hbm [shape: f32[2,16,128], index: 2, kind: output, shape index: {}]
  %s3 = sld [smem:[#allocation0]]
  $region22: #{tpu_custom_call.1} parent=0
    _
  %s5 = ssub.s32 1, %s3
  %s6 = scalar_select 0, %s5, %s3
  $region1: #{tpu_custom_call.1} parent=0
    #allocation2 [shape = 'u8[16384]{0}', space=vmem, size = 0x4000, scoped, tag = 'input window, operand 0, single buffered']
    #allocation3 [shape = 's32[1]{0}', space=sflag, size = 0x4, scoped, tag = 'scoped memory for tpu_custom_call.1']
    #allocation4 [shape = 's32[1]{0}', space=sflag, size = 0x4, scoped, tag = 'scoped memory for tpu_custom_call.1']
    #allocation5 [shape = 'u8[16384]{0}', space=vmem, size = 0x4000, scoped, tag = 'output window, operand 0, single buffered']
    %7 = vsyncpa [#allocation3], 0
    %8 = vsyncpa [#allocation4], 0
    // Predicated region
    $region2: #{tpu_custom_call.1} parent=1 // pred_check
      _
    $region3: #{tpu_custom_call.1} parent=1 // pred_check_branch
      %10 = sbr.rel (0) target = $region5
    $region4: #{tpu_custom_call.1} parent=1 // pred_region
      %s12 = ssub.s32 512, 512
      %13 = vsyncadd [#allocation3], %s12
      %s14 = sshll.u32 [#allocation2], 4
      %s15 = int_to_ptr.vmem [resolvable:$true] %s14
      %20 = dma.hbm_to_vmem [thread:$0]  %s0, 512, %s15, [#allocation3], 128, 128, 8
    $region5: #{tpu_custom_call.1} parent=1 // pred_fallthru
      _
    // Predicated region
    $region6: #{tpu_custom_call.1} parent=1 // pred_check
      _
    $region7: #{tpu_custom_call.1} parent=1 // pred_check_branch
      %22 = sbr.rel (0) target = $region9
    $region8: #{tpu_custom_call.1} parent=1 // pred_region
      _
    $region9: #{tpu_custom_call.1} parent=1 // pred_fallthru
      _
    // Predicated region
    $region10: #{tpu_custom_call.1} parent=1 // pred_check
      _
    $region11: #{tpu_custom_call.1} parent=1 // pred_check_branch
      %24 = sbr.rel (0) target = $region13
    $region12: #{tpu_custom_call.1} parent=1 // pred_region
      %25 = dma.done [#allocation3], 512
    $region13: #{tpu_custom_call.1} parent=1 // pred_fallthru
      _
    %v28 = vld [vmem:[#allocation2] sm:$0xff]
    %v29 = vld [vmem:[#allocation2 + $0x8] sm:$0xff]
    %v30 = vld [vmem:[#allocation2 + $0x10] sm:$0xff]
    %v31 = vld [vmem:[#allocation2 + $0x18] sm:$0xff]
    %v32 = vld [vmem:[%s1] sm:$0x1]
    %v33 = vld [vmem:[%s1 + $0x1] sm:$0x1]
    %vm34 = vnez %v32
    %vm35 = vnez %v33
    %v36 = vsel %vm34, 16843009, 0
    %v37 = vsel %vm35, 16843009, 0
    %v38 = vunpack.c.0.s8 %v36
    %v39 = vunpack.c.0.s8 %v37
    %vm40 = vcmp.ne.s32.totalorder %v38, 0
    %vm41 = vcmp.ne.s32.totalorder %v39, 0
    %v42 = vsel %vm40, 1, 0
    %v43 = vsel %vm41, 1, 0
    %v44 = vlaneseq
    %v45 = vshrl.u32 %v44, 7
    %v46 = vsub.s32 0, %v45
    %v47 = vrot.slane %v42, %v46
    %v48 = vlaneseq
    %v49 = vshrl.u32 %v48, 7
    %v50 = vsub.s32 0, %v49
    %v51 = vrot.slane %v43, %v50
    %vm52 = vcmp.eq.s32.totalorder %v47, 1
    %vm53 = vcmp.eq.s32.totalorder %v51, 1
    %v54 = vsel %vm52, %v28, 0.0
    %v55 = vsel %vm52, %v29, 0.0
    %v56 = vsel %vm53, %v30, 0.0
    %v57 = vsel %vm53, %v31, 0.0
    %58 = vst [vmem:[#allocation5] sm:$0xff] %v54
    %59 = vst [vmem:[#allocation5 + $0x8] sm:$0xff] %v55
    %60 = vst [vmem:[#allocation5 + $0x10] sm:$0xff] %v56
    %61 = vst [vmem:[#allocation5 + $0x18] sm:$0xff] %v57
    // Predicated region
    $region14: #{tpu_custom_call.1} parent=1 // pred_check
      _
    $region15: #{tpu_custom_call.1} parent=1 // pred_check_branch
      %63 = sbr.rel (0) target = $region17
    $region16: #{tpu_custom_call.1} parent=1 // pred_region
      %s65 = ssub.s32 512, 512
      %66 = vsyncadd [#allocation4], %s65
      %s67 = sshll.u32 [#allocation5], 4
      %s68 = int_to_ptr.vmem [resolvable:$true] %s67
      %73 = dma.vmem_to_hbm [thread:$0]  %s68, 512, %s2, [#allocation4], 128, 128, 8
    $region17: #{tpu_custom_call.1} parent=1 // pred_fallthru
      _
    // Predicated region
    $region18: #{tpu_custom_call.1} parent=1 // pred_check
      _
    $region19: #{tpu_custom_call.1} parent=1 // pred_check_branch
      %75 = sbr.rel (0) target = $region21
    $region20: #{tpu_custom_call.1} parent=1 // pred_region
      %76 = dma.done [#allocation4], 512
    $region21: #{tpu_custom_call.1} parent=1 // pred_fallthru
      _
    %77 = vsyncpa [#allocation3], 1
    %78 = vsyncpa [#allocation4], 1

</llo_original>
